<compile_context>
chip_gen: v7x
topology: tpu7x:2x2x1
jax: 0.10.0
libtpu: 0.0.40
codegen_flags: <defaults>
</compile_context>

<pallas_src>
import math

import jax
import jax.numpy as jnp
from jax.experimental import pallas as pl
from jax.experimental.pallas import tpu as pltpu


# ---------------------------------------------------------------------------
# Kernels
# ---------------------------------------------------------------------------

def _proj_cls_kernel(x_ref, w1_ref, b1_ref, w2_ref, b2_ref, hidden_ref, logits_ref):
    # x_ref:      [rows, PACK*D_in]
    # w1_ref:     [PACK*D_in,   PACK*D_proj]   b1_ref: [1, PACK*D_proj]
    # w2_ref:     [PACK*D_proj, PACK*L]        b2_ref: [1, PACK*L]
    # hidden_ref: [rows, PACK*D_proj]          logits_ref: [rows, PACK*L]
    x = x_ref[...]
    h = jnp.dot(x, w1_ref[...], preferred_element_type=jnp.float32) + b1_ref[...]
    # Stage the hidden through its VMEM output buffer instead of keeping the f32
    # intermediate live across the second matmul (lower vreg pressure at large
    # row tiles, and the classifier consumes the stored-hidden dtype — torch parity).
    hidden_ref[...] = h.astype(hidden_ref.dtype)
    # TODO(synk): dropout is identity in eval mode; train-mode parity would need
    # pltpu.prng_seed / pltpu.prng_random_bits masking of the hidden here.
    logits = (jnp.dot(hidden_ref[...], w2_ref[...], preferred_element_type=jnp.float32)
              + b2_ref[...])
    logits_ref[...] = logits.astype(logits_ref.dtype)


def _proj_cls_fused_kernel(x_ref, w1_ref, b1_ref, w12_ref, b12_ref,
                           hidden_ref, logits_ref):
    # Eval-mode fused logits path: logits = x @ (W1 @ W2) + (b1 @ W2 + b2).
    x = x_ref[...]
    hidden_ref[...] = (jnp.dot(x, w1_ref[...], preferred_element_type=jnp.float32)
                       + b1_ref[...]).astype(hidden_ref.dtype)
    logits_ref[...] = (jnp.dot(x, w12_ref[...], preferred_element_type=jnp.float32)
                       + b12_ref[...]).astype(logits_ref.dtype)


# ---------------------------------------------------------------------------
# Wrapper helpers
# ---------------------------------------------------------------------------

def _round_up(a, b):
    return (a + b - 1) // b * b


def _lane_factor(d):
    """Smallest p such that (p * d) % 128 == 0."""
    return 128 // math.gcd(128, int(d))


def _choose_pack(d_in, d_proj, label_num, act_itemsize, w_itemsize):
    """Row-packing factor, capped so block-diag MXU inflation stays mem-bound.

    f32 activations: cap 2 (v5e f32 MXU roofline); bf16: 4; int8/fp8: 8.
    Prefers a pack that makes x / hidden / logits all lane-dense, otherwise just
    the hidden slab (dominant output bytes), otherwise falls back to pack=1.
    """
    cap = {4: 2, 2: 4, 1: 8}.get(int(act_itemsize), 2)
    want_all = 1
    for d in (d_in, d_proj, label_num):
        f = _lane_factor(d)
        want_all = want_all * f // math.gcd(want_all, f)   # lcm
    need_hidden = _lane_factor(d_proj)
    if want_all <= cap:
        pack = want_all
    elif need_hidden <= cap:
        pack = need_hidden
    else:
        pack = 1
    # Resident block-diag weights are double-buffered by default; keep them small.
    resident = 2 * pack * pack * (d_in * d_proj + d_proj * label_num) * w_itemsize
    if resident > (8 << 20):
        pack = 1
    return pack


def _block_diag(w, pack):
    """[a, b] -> [pack*a, pack*b] with `pack` copies of `w` on the diagonal."""
    if pack == 1:
        return w
    a, b = w.shape
    eye = jnp.eye(pack, dtype=w.dtype)
    return (eye[:, None, :, None] * w[None, :, None, :]).reshape(pack * a, pack * b)


# ---------------------------------------------------------------------------
# Factory: packs weights once, returns the forward function
# ---------------------------------------------------------------------------

def make_project_cls_forward(w_proj, b_proj, w_cls, b_cls, *,
                             act_dtype=None, fuse_logits=False,
                             tile_m_target=2048):
    """Build the eval-mode forward for ProjectClsLayer.

    Weights are stored [in, out] (transposed vs. torch nn.Linear's [out, in]).
    Packed (block-diagonal) weights are built once here and reused every call.
    """
    d_in, d_proj = w_proj.shape
    label_num = int(w_cls.shape[1])
    act_dtype = jnp.dtype(act_dtype if act_dtype is not None else w_proj.dtype)
    act_itemsize = act_dtype.itemsize
    w_itemsize = jnp.dtype(w_proj.dtype).itemsize

    pack = _choose_pack(d_in, d_proj, label_num, act_itemsize, w_itemsize)
    sublanes = max(8, 32 // act_itemsize)        # f32: 8, bf16: 16, int8/fp8: 32
    row_quantum = sublanes * pack

    # --- packed weights, built once (amortized across calls) -----------------
    w1p = _block_diag(w_proj, pack)                             # [P*D_in, P*D_proj]
    b1p = jnp.tile(b_proj, pack).reshape(1, pack * d_proj)
    if fuse_logits:
        w12 = jnp.dot(w_proj, w_cls,
                      preferred_element_type=jnp.float32).astype(w_cls.dtype)
        b12 = (jnp.dot(b_proj, w_cls, preferred_element_type=jnp.float32)
               + b_cls).astype(b_cls.dtype)
        w2p = _block_diag(w12, pack)                            # [P*D_in, P*L]
        b2p = jnp.tile(b12, pack).reshape(1, pack * label_num)
        kernel = _proj_cls_fused_kernel
    else:
        w2p = _block_diag(w_cls, pack)                          # [P*D_proj, P*L]
        b2p = jnp.tile(b_cls, pack).reshape(1, pack * label_num)
        kernel = _proj_cls_kernel

    resident_bytes = sum(int(a.size) * jnp.dtype(a.dtype).itemsize
                         for a in (w1p, b1p, w2p, b2p))

    def forward(x):
        lead = x.shape[:-1]
        assert x.shape[-1] == d_in
        m = int(math.prod(lead))
        dtype = x.dtype
        itemsize = jnp.dtype(dtype).itemsize

        # Pad only to the row quantum (8*pack f32 / 16*pack bf16), never to tile_m.
        m_pad = _round_up(m, row_quantum)
        m_rows = m_pad // pack                       # packed (sublane) rows

        # Row tile: big enough to amortize the ~0.35us per-grid-step overhead,
        # capped so v7x's two TensorCores both get at least one step.
        tile_m = min(_round_up(tile_m_target, row_quantum), m_pad)
        if m_pad > row_quantum:
            tile_m = min(tile_m, _round_up(pl.cdiv(m_pad, 2), row_quantum))
        rows = tile_m // pack
        n_tiles = pl.cdiv(m_rows, rows)              # ragged last block masked by Pallas

        x2d = x.reshape(m, d_in)
        if m_pad != m:
            x2d = jnp.pad(x2d, ((0, m_pad - m), (0, 0)))   # < row_quantum junk rows
        xp = x2d.reshape(m_rows, pack * d_in)

        # VMEM budget from actual buffer sizes (x / hidden / logits tiles are
        # double-buffered; resident weights are also double-buffered by default).
        stream_bytes = 2 * rows * pack * (d_in + d_proj + label_num) * itemsize
        vmem_limit = int(min(max(2 * (stream_bytes + 2 * resident_bytes) + (4 << 20),
                                 16 << 20),
                             48 << 20))

        cost = pl.CostEstimate(
            flops=2 * m_pad * pack * (d_in * d_proj
                                      + (d_in if fuse_logits else d_proj) * label_num),
            transcendentals=0,
            bytes_accessed=itemsize * (xp.size + m_pad * (d_proj + label_num))
                           + resident_bytes,
        )

        hidden_p, logits_p = pl.pallas_call(
            kernel,
            out_shape=(
                jax.ShapeDtypeStruct((m_rows, pack * d_proj), dtype),
                jax.ShapeDtypeStruct((m_rows, pack * label_num), dtype),
            ),
            grid=(n_tiles,),
            in_specs=[
                pl.BlockSpec((rows, pack * d_in), lambda i: (i, 0)),   # streamed
                pl.BlockSpec(w1p.shape, lambda i: (0, 0)),             # resident
                pl.BlockSpec(b1p.shape, lambda i: (0, 0)),             # resident
                pl.BlockSpec(w2p.shape, lambda i: (0, 0)),             # resident
                pl.BlockSpec(b2p.shape, lambda i: (0, 0)),             # resident
            ],
            out_specs=(
                pl.BlockSpec((rows, pack * d_proj), lambda i: (i, 0)),
                pl.BlockSpec((rows, pack * label_num), lambda i: (i, 0)),
            ),
            compiler_params=pltpu.CompilerParams(
                dimension_semantics=("parallel",),   # megacore sharding on v7x
                vmem_limit_bytes=vmem_limit,
            ),
            cost_estimate=cost,
        )(xp, w1p, b1p, w2p, b2p)

        hidden = hidden_p.reshape(m_pad, d_proj)
        logits = logits_p.reshape(m_pad, label_num)
        if m_pad != m:                               # skip the HBM copy when aligned
            hidden = hidden[:m]
            logits = logits[:m]
        return (hidden.reshape(tuple(lead) + (d_proj,)),
                logits.reshape(tuple(lead) + (label_num,)))

    return forward


# ---------------------------------------------------------------------------
# Self-test
# ---------------------------------------------------------------------------

if __name__ == "__main__":
    # Small config consistent with the module:
    #   input_hidden_size = 32, proj_hidden_dim = 64, label_num = 16
    batch, seq = 2, 8
    input_hidden_size = 32
    proj_hidden_dim = 64
    label_num = 16

    key = jax.random.PRNGKey(0)
    k_x, k_w1, k_b1, k_w2, k_b2, k_x2 = jax.random.split(key, 6)

    x = jax.random.normal(k_x, (batch, seq, input_hidden_size), dtype=jnp.float32)
    # Stored as [in, out] (transposed vs. torch's nn.Linear weight [out, in]).
    w_proj = jax.random.normal(k_w1, (input_hidden_size, proj_hidden_dim),
                               dtype=jnp.float32) * 0.05
    b_proj = jax.random.normal(k_b1, (proj_hidden_dim,), dtype=jnp.float32) * 0.05
    w_cls = jax.random.normal(k_w2, (proj_hidden_dim, label_num),
                              dtype=jnp.float32) * 0.05
    b_cls = jax.random.normal(k_b2, (label_num,), dtype=jnp.float32) * 0.05

    # Packed weights are built once; `forward` is reused across calls.
    forward = make_project_cls_forward(w_proj, b_proj, w_cls, b_cls)

    hidden, logits = forward(x)
    jax.block_until_ready((hidden, logits))

    # Reference check in plain JAX.
    hidden_ref = x @ w_proj + b_proj
    logits_ref = hidden_ref @ w_cls + b_cls
    assert hidden.shape == (batch, seq, proj_hidden_dim)
    assert logits.shape == (batch, seq, label_num)
    assert jnp.allclose(hidden, hidden_ref, atol=1e-5, rtol=1e-5)
    assert jnp.allclose(logits, logits_ref, atol=1e-5, rtol=1e-5)

    # Non-row-quantum-aligned M exercises the (small) pad + slice path.
    x2 = jax.random.normal(k_x2, (3, 7, input_hidden_size), dtype=jnp.float32)
    h2, l2 = forward(x2)
    jax.block_until_ready((h2, l2))
    h2_ref = x2 @ w_proj + b_proj
    l2_ref = h2_ref @ w_cls + b_cls
    assert jnp.allclose(h2, h2_ref, atol=1e-5, rtol=1e-5)
    assert jnp.allclose(l2, l2_ref, atol=1e-5, rtol=1e-5)

    # Optional eval-only fused-logits path (changes f32 summation order slightly).
    forward_fused = make_project_cls_forward(w_proj, b_proj, w_cls, b_cls,
                                             fuse_logits=True)
    hf, lf = forward_fused(x)
    jax.block_until_ready((hf, lf))
    assert jnp.allclose(hf, hidden_ref, atol=1e-5, rtol=1e-5)
    assert jnp.allclose(lf, logits_ref, atol=1e-4, rtol=1e-4)

    print("KERNEL_OK")
</pallas_src>

<mosaic_0001>
module attributes {stable_mosaic.version = 11 : i64} {
  func.func @_proj_cls_kernel(%arg0: i32, %arg1: memref<8x64xf32, #tpu.memory_space<vmem>>, %arg2: memref<64x128xf32, #tpu.memory_space<vmem>>, %arg3: memref<1x128xf32, #tpu.memory_space<vmem>>, %arg4: memref<128x32xf32, #tpu.memory_space<vmem>>, %arg5: memref<1x32xf32, #tpu.memory_space<vmem>>, %arg6: memref<8x128xf32, #tpu.memory_space<vmem>>, %arg7: memref<8x32xf32, #tpu.memory_space<vmem>>) attributes {dimension_semantics = [#tpu.dimension_semantics<parallel>], iteration_bounds = array<i64: 1>, scalar_prefetch = 0 : i64, scratch_operands = 0 : i64, tpu.core_type = #tpu.core_type<tc>, window_params = [{transform_indices = @transform_0, window_bounds = array<i64: 8, 64>}, {pipeline_mode = #tpu.pipeline_mode<synchronous>, transform_indices = @transform_1, window_bounds = array<i64: 64, 128>}, {pipeline_mode = #tpu.pipeline_mode<synchronous>, transform_indices = @transform_2, window_bounds = array<i64: 1, 128>}, {pipeline_mode = #tpu.pipeline_mode<synchronous>, transform_indices = @transform_3, window_bounds = array<i64: 128, 32>}, {pipeline_mode = #tpu.pipeline_mode<synchronous>, transform_indices = @transform_4, window_bounds = array<i64: 1, 32>}, {transform_indices = @transform_5, window_bounds = array<i64: 8, 128>}, {transform_indices = @transform_6, window_bounds = array<i64: 8, 32>}]} {
    %c0 = arith.constant 0 : index
    %c0_0 = arith.constant 0 : index
    %0 = vector.load %arg1[%c0, %c0_0] : memref<8x64xf32, #tpu.memory_space<vmem>>, vector<8x64xf32>
    %c0_1 = arith.constant 0 : index
    %c0_2 = arith.constant 0 : index
    %1 = vector.load %arg2[%c0_1, %c0_2] : memref<64x128xf32, #tpu.memory_space<vmem>>, vector<64x128xf32>
    %cst = arith.constant dense<0.000000e+00> : vector<8x128xf32>
    %2 = tpu.matmul %0, %1, %cst {dimension_numbers = #tpu.dot_dimension_numbers<[1], [0], [0], [1], [0, 0, 1, 1], [], []>} : vector<8x64xf32>, vector<64x128xf32>, vector<8x128xf32> -> vector<8x128xf32>
    %c0_3 = arith.constant 0 : index
    %c0_4 = arith.constant 0 : index
    %3 = vector.load %arg3[%c0_3, %c0_4] : memref<1x128xf32, #tpu.memory_space<vmem>>, vector<1x128xf32>
    %4 = vector.broadcast %3 : vector<1x128xf32> to vector<8x128xf32>
    %5 = arith.addf %2, %4 : vector<8x128xf32>
    %c0_5 = arith.constant 0 : index
    %c0_6 = arith.constant 0 : index
    %6 = vector.load %arg6[%c0_5, %c0_6] : memref<8x128xf32, #tpu.memory_space<vmem>>, vector<8x128xf32>
    tpu.vector_store %arg6[%c0_5, %c0_6], %5 {strides = array<i32>} : memref<8x128xf32, #tpu.memory_space<vmem>>, vector<8x128xf32>,
    %c0_7 = arith.constant 0 : index
    %c0_8 = arith.constant 0 : index
    %7 = vector.load %arg6[%c0_7, %c0_8] : memref<8x128xf32, #tpu.memory_space<vmem>>, vector<8x128xf32>
    %c0_9 = arith.constant 0 : index
    %c0_10 = arith.constant 0 : index
    %8 = vector.load %arg4[%c0_9, %c0_10] : memref<128x32xf32, #tpu.memory_space<vmem>>, vector<128x32xf32>
    %cst_11 = arith.constant dense<0.000000e+00> : vector<8x32xf32>
    %9 = tpu.matmul %7, %8, %cst_11 {dimension_numbers = #tpu.dot_dimension_numbers<[1], [0], [0], [1], [0, 0, 1, 1], [], []>} : vector<8x128xf32>, vector<128x32xf32>, vector<8x32xf32> -> vector<8x32xf32>
    %c0_12 = arith.constant 0 : index
    %c0_13 = arith.constant 0 : index
    %10 = vector.load %arg5[%c0_12, %c0_13] : memref<1x32xf32, #tpu.memory_space<vmem>>, vector<1x32xf32>
    %11 = vector.broadcast %10 : vector<1x32xf32> to vector<8x32xf32>
    %12 = arith.addf %9, %11 : vector<8x32xf32>
    %c0_14 = arith.constant 0 : index
    %c0_15 = arith.constant 0 : index
    %13 = vector.load %arg7[%c0_14, %c0_15] : memref<8x32xf32, #tpu.memory_space<vmem>>, vector<8x32xf32>
    tpu.vector_store %arg7[%c0_14, %c0_15], %12 {strides = array<i32>} : memref<8x32xf32, #tpu.memory_space<vmem>>, vector<8x32xf32>,
    return
  }
  func.func @transform_0(%arg0: i32) -> (i32, i32) {
    %c0_i32 = arith.constant 0 : i32
    %c0_i32_0 = arith.constant 0 : i32
    return %arg0, %c0_i32 : i32, i32
  }
  func.func @transform_1(%arg0: i32) -> (i32, i32) {
    %c0_i32 = arith.constant 0 : i32
    %c0_i32_0 = arith.constant 0 : i32
    %c0_i32_1 = arith.constant 0 : i32
    return %c0_i32, %c0_i32_0 : i32, i32
  }
  func.func @transform_2(%arg0: i32) -> (i32, i32) {
    %c0_i32 = arith.constant 0 : i32
    %c0_i32_0 = arith.constant 0 : i32
    %c0_i32_1 = arith.constant 0 : i32
    return %c0_i32, %c0_i32_0 : i32, i32
  }
  func.func @transform_3(%arg0: i32) -> (i32, i32) {
    %c0_i32 = arith.constant 0 : i32
    %c0_i32_0 = arith.constant 0 : i32
    %c0_i32_1 = arith.constant 0 : i32
    return %c0_i32, %c0_i32_0 : i32, i32
  }
  func.func @transform_4(%arg0: i32) -> (i32, i32) {
    %c0_i32 = arith.constant 0 : i32
    %c0_i32_0 = arith.constant 0 : i32
    %c0_i32_1 = arith.constant 0 : i32
    return %c0_i32, %c0_i32_0 : i32, i32
  }
  func.func @transform_5(%arg0: i32) -> (i32, i32) {
    %c0_i32 = arith.constant 0 : i32
    %c0_i32_0 = arith.constant 0 : i32
    return %arg0, %c0_i32 : i32, i32
  }
  func.func @transform_6(%arg0: i32) -> (i32, i32) {
    %c0_i32 = arith.constant 0 : i32
    %c0_i32_0 = arith.constant 0 : i32
    return %arg0, %c0_i32 : i32, i32
  }
}

</mosaic_0001>

<llo_original>
// kernel: tpu_custom_call.1
$region0: #{tpu_custom_call.1}
  #allocation0 [shape = 'u32[]', space=smem, size = 0x4, offset = 0x4, fixed_abs, tag = 'smem constant byte address 0x4 - core index']
  #allocation1 [shape = 'u32[144,128]{1,0:T(1,128)}', space=vmem, size = 0x12000, scoped, tag = 'internal scratch']
  %s0 = inlined_call_operand.vmem [shape: f32[8,64], index: 0, kind: input, shape index: {}]
  %s1 = inlined_call_operand.vmem [shape: f32[64,128], index: 1, kind: input, shape index: {}]
  %s2 = inlined_call_operand.vmem [shape: f32[1,128], index: 2, kind: input, shape index: {}]
  %s3 = inlined_call_operand.vmem [shape: f32[128,32], index: 3, kind: input, shape index: {}]
  %s4 = inlined_call_operand.vmem [shape: f32[1,32], index: 4, kind: input, shape index: {}]
  %s5 = inlined_call_operand.hbm [shape: f32[8,128], index: 5, kind: output, shape index: {0}]
  %s6 = inlined_call_operand.hbm [shape: f32[8,32], index: 6, kind: output, shape index: {1}]
  %7 = xla_tuple %s5, %s6
  %s8 = sld [smem:[#allocation0]]
  $region38: #{tpu_custom_call.1} parent=0
    _
  %s10 = ssub.s32 1, %s8
  %s11 = scalar_select 0, %s10, %s8
  $region1: #{tpu_custom_call.1} parent=0
    #allocation2 [shape = 'u8[4096]{0}', space=vmem, size = 0x1000, scoped, tag = 'output window, operand 0, single buffered']
    #allocation3 [shape = 's32[1]{0}', space=sflag, size = 0x4, scoped, tag = 'scoped memory for tpu_custom_call.1']
    #allocation4 [shape = 'u8[4096]{0}', space=vmem, size = 0x1000, scoped, tag = 'output window, operand 1, single buffered']
    #allocation5 [shape = 's32[1]{0}', space=sflag, size = 0x4, scoped, tag = 'scoped memory for tpu_custom_call.1']
    %12 = vsyncpa [#allocation3], 0
    %13 = vsyncpa [#allocation5], 0
    // Predicated region
    $region2: #{tpu_custom_call.1} parent=1 // pred_check
      _
    $region3: #{tpu_custom_call.1} parent=1 // pred_check_branch
      %15 = sbr.rel (0) target = $region5
    $region4: #{tpu_custom_call.1} parent=1 // pred_region
      _
    $region5: #{tpu_custom_call.1} parent=1 // pred_fallthru
      _
    // Predicated region
    $region6: #{tpu_custom_call.1} parent=1 // pred_check
      _
    $region7: #{tpu_custom_call.1} parent=1 // pred_check_branch
      %17 = sbr.rel (0) target = $region9
    $region8: #{tpu_custom_call.1} parent=1 // pred_region
      _
    $region9: #{tpu_custom_call.1} parent=1 // pred_fallthru
      _
    // Predicated region
    $region10: #{tpu_custom_call.1} parent=1 // pred_check
      _
    $region11: #{tpu_custom_call.1} parent=1 // pred_check_branch
      %19 = sbr.rel (0) target = $region13
    $region12: #{tpu_custom_call.1} parent=1 // pred_region
      _
    $region13: #{tpu_custom_call.1} parent=1 // pred_fallthru
      _
    // Predicated region
    $region14: #{tpu_custom_call.1} parent=1 // pred_check
      _
    $region15: #{tpu_custom_call.1} parent=1 // pred_check_branch
      %21 = sbr.rel (0) target = $region17
    $region16: #{tpu_custom_call.1} parent=1 // pred_region
      _
    $region17: #{tpu_custom_call.1} parent=1 // pred_fallthru
      _
    // Predicated region
    $region18: #{tpu_custom_call.1} parent=1 // pred_check
      _
    $region19: #{tpu_custom_call.1} parent=1 // pred_check_branch
      %23 = sbr.rel (0) target = $region21
    $region20: #{tpu_custom_call.1} parent=1 // pred_region
      _
    $region21: #{tpu_custom_call.1} parent=1 // pred_fallthru
      _
    %v24 = vld [vmem:[%s0] sm:$0xff]
    %v25 = vld [vmem:[%s1] sm:$0xff]
    %v26 = vld [vmem:[%s1 + $0x8] sm:$0xff]
    %v27 = vld [vmem:[%s1 + $0x10] sm:$0xff]
    %v28 = vld [vmem:[%s1 + $0x18] sm:$0xff]
    %v29 = vld [vmem:[%s1 + $0x20] sm:$0xff]
    %v30 = vld [vmem:[%s1 + $0x28] sm:$0xff]
    %v31 = vld [vmem:[%s1 + $0x30] sm:$0xff]
    %v32 = vld [vmem:[%s1 + $0x38] sm:$0xff]
    %v33 = vld [vmem:[%s2] sm:$0x1]
    %v35 = vlaneseq
    %v36 = vshrl.u32 %v35, 7
    %v37 = vsub.s32 0, %v36
    %v38 = vrot.slane %v33, %v37
    %vm40 = vcmask 523264
    %v42 = vsel %vm40, %v24, 0
    %44 = vmatprep.subr.mxu0 0.0
    %45 = vmatpush1.msra.mxu0 %v25
    %46 = vmatprep.subr.mxu0 0.0
    %47 = vmatpush1.msra.mxu0 %v26
    %48 = vmatprep.subr.mxu0 0.0
    %49 = vmatpush1.msra.mxu0 %v27
    %50 = vmatprep.subr.mxu0 0.0
    %51 = vmatpush1.msra.mxu0 %v28
    %52 = vmatprep.subr.mxu0 0.0
    %53 = vmatpush1.msra.mxu0 %v29
    %54 = vmatprep.subr.mxu0 0.0
    %55 = vmatpush1.msra.mxu0 %v30
    %56 = vmatprep.subr.mxu0 0.0
    %57 = vmatpush1.msra.mxu0 %v31
    %58 = vmatprep.subr.mxu0 0.0
    %59 = vmatpush1.msra.mxu0 %v32
    %60 = vmatprep.subr.mxu0 0.0
    %61 = vmatpush1.msra.mxu0 0.0
    %62 = vmatprep.subr.mxu0 0.0
    %63 = vmatpush1.msra.mxu0 0.0
    %64 = vmatprep.subr.mxu0 0.0
    %65 = vmatpush1.msra.mxu0 0.0
    %66 = vmatprep.subr.mxu0 0.0
    %67 = vmatpush1.msra.mxu0 0.0
    %68 = vmatprep.subr.mxu0 0.0
    %69 = vmatpush1.msra.mxu0 0.0
    %70 = vmatprep.subr.mxu0 0.0
    %71 = vmatpush1.msra.mxu0 0.0
    %72 = vmatprep.subr.mxu0 0.0
    %73 = vmatpush1.msra.mxu0 0.0
    %74 = vmatprep.subr.mxu0 0.0
    %75 = vmatpush1.msra.mxu0 0.0
    %76 = vmatprep.subr.mxu0 0.0
    %77 = vmatpush1.msra.mxu0 0.0
    %78 = vmatprep.subr.mxu0 0.0
    %79 = vmatpush1.msra.mxu0 0.0
    %80 = vmatprep.subr.mxu0 0.0
    %81 = vmatpush1.msra.mxu0 0.0
    %82 = vmatprep.subr.mxu0 0.0
    %83 = vmatpush1.msra.mxu0 0.0
    %84 = vmatprep.subr.mxu0 0.0
    %85 = vmatpush1.msra.mxu0 0.0
    %86 = vmatprep.subr.mxu0 0.0
    %87 = vmatpush1.msra.mxu0 0.0
    %88 = vmatprep.subr.mxu0 0.0
    %89 = vmatpush1.msra.mxu0 0.0
    %90 = vmatprep.subr.mxu0 0.0
    %91 = vmatpush1.msra.mxu0 0.0
    %92 = vmatprep.subr.mxu0 0.0
    %93 = vmatpush1.msra.mxu0 0.0
    %94 = vmatprep.subr.mxu0 0.0
    %95 = vmatpush1.msra.mxu0 0.0
    %96 = vmatprep.subr.mxu0 0.0
    %97 = vmatpush1.msra.mxu0 0.0
    %98 = vmatprep.subr.mxu0 0.0
    %99 = vmatpush1.msra.mxu0 0.0
    %100 = vmatprep.subr.mxu0 0.0
    %101 = vmatpush1.msra.mxu0 0.0
    %102 = vmatprep.subr.mxu0 0.0
    %103 = vmatpush1.msra.mxu0 0.0
    %104 = vmatprep.subr.mxu0 0.0
    %105 = vmatpush1.msra.mxu0 0.0
    %106 = vmatprep.subr.mxu0 0.0
    %107 = vmatpush1.msra.mxu0 0.0
    %108 = vmatprep.mubr.f32.mxu0 0.0
    %109 = vmatmul.mubr.f32.gmra.mrb[0].mxu0 %v42
    %v110 = vpop.f32.mrb[0].mxu0
    %v111 = vadd.f32 %v38, %v110
    %v112 = vpop.f32.mrb[0].mxu0
    %113 = vdwg.mxu0
    %114 = vst [vmem:[#allocation2] sm:$0xff] %v111
    %v115 = vld [vmem:[#allocation2] sm:$0xff]
    %v116 = vld [vmem:[%s3] sm:$0xff]
    %v117 = vld [vmem:[%s3 + $0x8] sm:$0xff]
    %v118 = vld [vmem:[%s3 + $0x10] sm:$0xff]
    %v119 = vld [vmem:[%s3 + $0x18] sm:$0xff]
    %v120 = vld [vmem:[%s3 + $0x20] sm:$0xff]
    %v121 = vld [vmem:[%s3 + $0x28] sm:$0xff]
    %v122 = vld [vmem:[%s3 + $0x30] sm:$0xff]
    %v123 = vld [vmem:[%s3 + $0x38] sm:$0xff]
    %v124 = vld [vmem:[%s3 + $0x40] sm:$0xff]
    %v125 = vld [vmem:[%s3 + $0x48] sm:$0xff]
    %v126 = vld [vmem:[%s3 + $0x50] sm:$0xff]
    %v127 = vld [vmem:[%s3 + $0x58] sm:$0xff]
    %v128 = vld [vmem:[%s3 + $0x60] sm:$0xff]
    %v129 = vld [vmem:[%s3 + $0x68] sm:$0xff]
    %v130 = vld [vmem:[%s3 + $0x70] sm:$0xff]
    %v131 = vld [vmem:[%s3 + $0x78] sm:$0xff]
    %v132 = vld [vmem:[%s4] sm:$0x1]
    %v134 = vlaneseq
    %v135 = vshrl.u32 %v134, 7
    %v136 = vsub.s32 0, %v135
    %v137 = vrot.slane %v132, %v136
    %139 = vmatprep.subr.mxu0 0.0
    %140 = vmatpush1.msra.mxu0 %v116
    %141 = vmatprep.subr.mxu0 0.0
    %142 = vmatpush1.msra.mxu0 %v117
    %143 = vmatprep.subr.mxu0 0.0
    %144 = vmatpush1.msra.mxu0 %v118
    %145 = vmatprep.subr.mxu0 0.0
    %146 = vmatpush1.msra.mxu0 %v119
    %147 = vmatprep.subr.mxu0 0.0
    %148 = vmatpush1.msra.mxu0 %v120
    %149 = vmatprep.subr.mxu0 0.0
    %150 = vmatpush1.msra.mxu0 %v121
    %151 = vmatprep.subr.mxu0 0.0
    %152 = vmatpush1.msra.mxu0 %v122
    %153 = vmatprep.subr.mxu0 0.0
    %154 = vmatpush1.msra.mxu0 %v123
    %155 = vmatprep.subr.mxu0 0.0
    %156 = vmatpush1.msra.mxu0 %v124
    %157 = vmatprep.subr.mxu0 0.0
    %158 = vmatpush1.msra.mxu0 %v125
    %159 = vmatprep.subr.mxu0 0.0
    %160 = vmatpush1.msra.mxu0 %v126
    %161 = vmatprep.subr.mxu0 0.0
    %162 = vmatpush1.msra.mxu0 %v127
    %163 = vmatprep.subr.mxu0 0.0
    %164 = vmatpush1.msra.mxu0 %v128
    %165 = vmatprep.subr.mxu0 0.0
    %166 = vmatpush1.msra.mxu0 %v129
    %167 = vmatprep.subr.mxu0 0.0
    %168 = vmatpush1.msra.mxu0 %v130
    %169 = vmatprep.subr.mxu0 0.0
    %170 = vmatpush1.msra.mxu0 %v131
    %171 = vmatprep.subr.mxu0 0.0
    %172 = vmatpush1.msra.mxu0 0.0
    %173 = vmatprep.subr.mxu0 0.0
    %174 = vmatpush1.msra.mxu0 0.0
    %175 = vmatprep.subr.mxu0 0.0
    %176 = vmatpush1.msra.mxu0 0.0
    %177 = vmatprep.subr.mxu0 0.0
    %178 = vmatpush1.msra.mxu0 0.0
    %179 = vmatprep.subr.mxu0 0.0
    %180 = vmatpush1.msra.mxu0 0.0
    %181 = vmatprep.subr.mxu0 0.0
    %182 = vmatpush1.msra.mxu0 0.0
    %183 = vmatprep.subr.mxu0 0.0
    %184 = vmatpush1.msra.mxu0 0.0
    %185 = vmatprep.subr.mxu0 0.0
    %186 = vmatpush1.msra.mxu0 0.0
    %187 = vmatprep.subr.mxu0 0.0
    %188 = vmatpush1.msra.mxu0 0.0
    %189 = vmatprep.subr.mxu0 0.0
    %190 = vmatpush1.msra.mxu0 0.0
    %191 = vmatprep.subr.mxu0 0.0
    %192 = vmatpush1.msra.mxu0 0.0
    %193 = vmatprep.subr.mxu0 0.0
    %194 = vmatpush1.msra.mxu0 0.0
    %195 = vmatprep.subr.mxu0 0.0
    %196 = vmatpush1.msra.mxu0 0.0
    %197 = vmatprep.subr.mxu0 0.0
    %198 = vmatpush1.msra.mxu0 0.0
    %199 = vmatprep.subr.mxu0 0.0
    %200 = vmatpush1.msra.mxu0 0.0
    %201 = vmatprep.subr.mxu0 0.0
    %202 = vmatpush1.msra.mxu0 0.0
    %203 = vmatprep.mubr.f32.mxu0 0.0
    %204 = vmatmul.mubr.f32.gmra.mrb[0].mxu0 %v115
    %v205 = vpop.f32.mrb[0].mxu0
    %v206 = vadd.f32 %v137, %v205
    %v207 = vpop.f32.mrb[0].mxu0
    %208 = vdwg.mxu0
    %vm209 = vcmask 261120
    %210 = vst.msk [vmem:[#allocation4] sm:$0xff] %vm209, %v206
    // Predicated region
    $region22: #{tpu_custom_call.1} parent=1 // pred_check
      _
    $region23: #{tpu_custom_call.1} parent=1 // pred_check_branch
      %212 = sbr.rel (0) target = $region25
    $region24: #{tpu_custom_call.1} parent=1 // pred_region
      %s214 = ssub.s32 128, 128
      %215 = vsyncadd [#allocation3], %s214
      %s217 = sshll.u32 [#allocation2], 4
      %s218 = int_to_ptr.vmem [resolvable:$true] %s217
      %220 = dma.vmem_to_hbm [thread:$0]  %s218, 128, %s5, [#allocation3]
    $region25: #{tpu_custom_call.1} parent=1 // pred_fallthru
      _
    // Predicated region
    $region26: #{tpu_custom_call.1} parent=1 // pred_check
      _
    $region27: #{tpu_custom_call.1} parent=1 // pred_check_branch
      %222 = sbr.rel (0) target = $region29
    $region28: #{tpu_custom_call.1} parent=1 // pred_region
      %s224 = ssub.s32 128, 128
      %225 = vsyncadd [#allocation5], %s224
      %s227 = sshll.u32 [#allocation4], 4
      %s228 = int_to_ptr.vmem [resolvable:$true] %s227
      %230 = dma.vmem_to_hbm [thread:$0]  %s228, 128, %s6, [#allocation5]
    $region29: #{tpu_custom_call.1} parent=1 // pred_fallthru
      _
    // Predicated region
    $region30: #{tpu_custom_call.1} parent=1 // pred_check
      _
    $region31: #{tpu_custom_call.1} parent=1 // pred_check_branch
      %232 = sbr.rel (0) target = $region33
    $region32: #{tpu_custom_call.1} parent=1 // pred_region
      %233 = dma.done [#allocation3], 128
    $region33: #{tpu_custom_call.1} parent=1 // pred_fallthru
      _
    // Predicated region
    $region34: #{tpu_custom_call.1} parent=1 // pred_check
      _
    $region35: #{tpu_custom_call.1} parent=1 // pred_check_branch
      %235 = sbr.rel (0) target = $region37
    $region36: #{tpu_custom_call.1} parent=1 // pred_region
      %236 = dma.done [#allocation5], 128
    $region37: #{tpu_custom_call.1} parent=1 // pred_fallthru
      _
    %237 = vsyncpa [#allocation3], 1
    %238 = vsyncpa [#allocation5], 1

</llo_original>
